<compile_context>
chip_gen: v7x
topology: tpu7x:2x2x1
jax: 0.10.0
libtpu: 0.0.40
codegen_flags: <defaults>
</compile_context>

<pallas_src>
import jax
import jax.numpy as jnp
from jax import lax
from jax.experimental import pallas as pl
from jax.experimental.pallas import tpu as pltpu

_LANES = 128


def _adaptive_byol_kernel(packed_ref, out_ref):
    # packed_ref: (6,) f32 in SMEM -> [alpha, beta, gamma, fft, time, cross]
    # out_ref:    (1, 128) f32 in VMEM -> lane 0 = combined loss,
    #                                     lanes 1..3 = softmax weights
    a = packed_ref[0]
    b = packed_ref[1]
    g = packed_ref[2]
    lf = packed_ref[3]
    lt = packed_ref[4]
    lc = packed_ref[5]

    # Numerically stable softmax shift on the scalar path (no XLU max).
    m = jnp.maximum(jnp.maximum(a, b), g)

    lane = lax.broadcasted_iota(jnp.int32, (1, _LANES), 1)
    m0 = lane == 0
    m1 = lane == 1
    m2 = lane == 2
    m3 = lane == 3

    neg = jnp.float32(-1e30)  # exp(-1e30) underflows to exactly 0 in f32
    logits = jnp.where(m1, a - m,
             jnp.where(m2, b - m,
             jnp.where(m3, g - m, neg)))
    e = jnp.exp(logits)                                  # single EUP vector op

    losses = jnp.where(m1, lf,
             jnp.where(m2, lt,
             jnp.where(m3, lc, jnp.float32(0.0))))

    # ONE cross-lane reduce for both the softmax denominator and the weighted
    # loss numerator: rows of the sublane stack are [e ; e*losses].
    stacked = jnp.concatenate([e, e * losses], axis=0)   # (2, 128)
    sums = jnp.sum(stacked, axis=-1, keepdims=True)      # (2, 1)
    denom = sums[0:1, :]                                 # (1, 1)
    numer = sums[1:2, :]                                 # (1, 1)
    inv = 1.0 / denom                                    # exact; computed once
    loss = numer * inv                                   # (1, 1)

    w = e * inv            # 1/denom broadcast across 128 lanes exactly once
    # Single lane-dense store: lane 0 = loss (w there is exactly 0), 1..3 = w.
    out_ref[...] = jnp.where(m0, loss, w)


def _forward_impl(byol_loss_fft, byol_loss_time, byol_loss_cross,
                  alpha, beta, gamma):
    packed = jnp.stack(
        [alpha, beta, gamma, byol_loss_fft, byol_loss_time, byol_loss_cross]
    ).astype(jnp.float32)

    out = pl.pallas_call(
        _adaptive_byol_kernel,
        out_shape=jax.ShapeDtypeStruct((1, _LANES), jnp.float32),
        in_specs=[pl.BlockSpec(memory_space=pltpu.MemorySpace.SMEM)],
        out_specs=pl.BlockSpec((1, _LANES), lambda: (0, 0)),
        cost_estimate=pl.CostEstimate(
            flops=20, transcendentals=3, bytes_accessed=536),
    )(packed)

    # Single (1,4) read out of the tile; the split below fuses away under jit.
    head = lax.slice(out, (0, 0), (1, 4)).reshape(4)
    return head[0], head[1:4]


# TODO(synk): in production, fuse this epilogue into the kernel that produces
# the three BYOL losses (finalize block) — a standalone grid-1 pallas_call is
# pure fixed overhead and idles the second TensorCore on v7x.
@jax.custom_vjp
def adaptive_byol_loss(byol_loss_fft, byol_loss_time, byol_loss_cross,
                       alpha, beta, gamma):
    """Pallas equivalent of AdaptiveBYOLLoss.forward for scalar losses.

    Returns (byol_loss: scalar f32, weights: (3,) f32) matching
    (w[0]*fft + w[1]*time + w[2]*cross, softmax([alpha, beta, gamma])).
    """
    return _forward_impl(byol_loss_fft, byol_loss_time, byol_loss_cross,
                         alpha, beta, gamma)


def _adaptive_byol_fwd(lf, lt, lc, a, b, g):
    loss, w = _forward_impl(lf, lt, lc, a, b, g)
    return (loss, w), (jnp.asarray(lf, jnp.float32),
                       jnp.asarray(lt, jnp.float32),
                       jnp.asarray(lc, jnp.float32), w)


def _adaptive_byol_bwd(res, cts):
    lf, lt, lc, w = res
    d_loss, d_w = cts
    losses = jnp.stack([lf, lt, lc])
    d_losses = d_loss * w                       # grads wrt the three BYOL losses
    v = d_loss * losses + d_w                   # total cotangent on softmax output
    d_logits = w * (v - jnp.dot(v, w))          # softmax VJP wrt [alpha,beta,gamma]
    return (d_losses[0], d_losses[1], d_losses[2],
            d_logits[0], d_logits[1], d_logits[2])


adaptive_byol_loss.defvjp(_adaptive_byol_fwd, _adaptive_byol_bwd)


if __name__ == "__main__":
    # Deterministic parameter init (matches nn.Parameter(torch.tensor(0.25))).
    init_alpha = jnp.float32(0.25)
    init_beta = jnp.float32(0.25)
    init_gamma = jnp.float32(0.25)

    # Deterministic example scalar losses (BYOL losses are scalar means).
    key = jax.random.PRNGKey(0)
    k_fft, k_time, k_cross = jax.random.split(key, 3)
    byol_loss_fft = jax.random.uniform(k_fft, (), jnp.float32, 0.0, 4.0)
    byol_loss_time = jax.random.uniform(k_time, (), jnp.float32, 0.0, 4.0)
    byol_loss_cross = jax.random.uniform(k_cross, (), jnp.float32, 0.0, 4.0)

    fwd = jax.jit(adaptive_byol_loss)
    loss, weights = fwd(byol_loss_fft, byol_loss_time, byol_loss_cross,
                        init_alpha, init_beta, init_gamma)
    loss = jax.block_until_ready(loss)
    weights = jax.block_until_ready(weights)

    # Reference forward in plain JAX.
    p = jnp.stack([init_alpha, init_beta, init_gamma])
    w_ref = jax.nn.softmax(p)
    loss_ref = (w_ref[0] * byol_loss_fft + w_ref[1] * byol_loss_time
                + w_ref[2] * byol_loss_cross)
    assert jnp.allclose(weights, w_ref, atol=1e-6), (weights, w_ref)
    assert jnp.allclose(loss, loss_ref, atol=1e-6), (loss, loss_ref)

    # Autodiff check: alpha/beta/gamma are trainable nn.Parameters in the
    # original module; the custom_vjp makes jax.grad through the Pallas
    # forward work and match the plain-JAX reference.
    def scalar_loss(a, b, g):
        return adaptive_byol_loss(byol_loss_fft, byol_loss_time,
                                  byol_loss_cross, a, b, g)[0]

    def scalar_loss_ref(a, b, g):
        w = jax.nn.softmax(jnp.stack([a, b, g]))
        return (w[0] * byol_loss_fft + w[1] * byol_loss_time
                + w[2] * byol_loss_cross)

    grads = jax.jit(jax.grad(scalar_loss, argnums=(0, 1, 2)))(
        init_alpha, init_beta, init_gamma)
    grads_ref = jax.grad(scalar_loss_ref, argnums=(0, 1, 2))(
        init_alpha, init_beta, init_gamma)
    for gp, gr in zip(grads, grads_ref):
        gp = jax.block_until_ready(gp)
        assert jnp.allclose(gp, gr, atol=1e-6), (gp, gr)

    print("KERNEL_OK")
</pallas_src>

<mosaic_0001>
module attributes {stable_mosaic.version = 11 : i64} {
  func.func @_adaptive_byol_kernel(%arg0: memref<6xf32, #tpu.memory_space<smem>>, %arg1: memref<1x128xf32, #tpu.memory_space<vmem>>) attributes {dimension_semantics = [], scalar_prefetch = 0 : i64, scratch_operands = 0 : i64, tpu.core_type = #tpu.core_type<tc>} {
    %c0 = arith.constant 0 : index
    %0 = memref.load %arg0[%c0] : memref<6xf32, #tpu.memory_space<smem>>
    %c1 = arith.constant 1 : index
    %1 = memref.load %arg0[%c1] : memref<6xf32, #tpu.memory_space<smem>>
    %c2 = arith.constant 2 : index
    %2 = memref.load %arg0[%c2] : memref<6xf32, #tpu.memory_space<smem>>
    %c3 = arith.constant 3 : index
    %3 = memref.load %arg0[%c3] : memref<6xf32, #tpu.memory_space<smem>>
    %c4 = arith.constant 4 : index
    %4 = memref.load %arg0[%c4] : memref<6xf32, #tpu.memory_space<smem>>
    %c5 = arith.constant 5 : index
    %5 = memref.load %arg0[%c5] : memref<6xf32, #tpu.memory_space<smem>>
    %6 = arith.maximumf %0, %1 : f32
    %7 = arith.maximumf %6, %2 : f32
    %8 = tpu.iota {dimensions = array<i32: 1>} : vector<1x128xi32>
    %c0_i32 = arith.constant 0 : i32
    %9 = vector.broadcast %c0_i32 : i32 to vector<1x128xi32>
    %10 = arith.cmpi eq, %8, %9 : vector<1x128xi32>
    %c1_i32 = arith.constant 1 : i32
    %11 = vector.broadcast %c1_i32 : i32 to vector<1x128xi32>
    %12 = arith.cmpi eq, %8, %11 : vector<1x128xi32>
    %c2_i32 = arith.constant 2 : i32
    %13 = vector.broadcast %c2_i32 : i32 to vector<1x128xi32>
    %14 = arith.cmpi eq, %8, %13 : vector<1x128xi32>
    %c3_i32 = arith.constant 3 : i32
    %15 = vector.broadcast %c3_i32 : i32 to vector<1x128xi32>
    %16 = arith.cmpi eq, %8, %15 : vector<1x128xi32>
    %17 = arith.subf %0, %7 : f32
    %18 = arith.subf %1, %7 : f32
    %19 = arith.subf %2, %7 : f32
    %cst = arith.constant -1.000000e+30 : f32
    %20 = vector.broadcast %19 : f32 to vector<1x128xf32>
    %21 = vector.broadcast %cst : f32 to vector<1x128xf32>
    %22 = arith.select %16, %20, %21 : vector<1x128xi1>, vector<1x128xf32>
    %23 = vector.broadcast %18 : f32 to vector<1x128xf32>
    %24 = arith.select %14, %23, %22 : vector<1x128xi1>, vector<1x128xf32>
    %25 = vector.broadcast %17 : f32 to vector<1x128xf32>
    %26 = arith.select %12, %25, %24 : vector<1x128xi1>, vector<1x128xf32>
    %27 = math.exp %26 : vector<1x128xf32>
    %cst_0 = arith.constant 0.000000e+00 : f32
    %28 = vector.broadcast %5 : f32 to vector<1x128xf32>
    %29 = vector.broadcast %cst_0 : f32 to vector<1x128xf32>
    %30 = arith.select %16, %28, %29 : vector<1x128xi1>, vector<1x128xf32>
    %31 = vector.broadcast %4 : f32 to vector<1x128xf32>
    %32 = arith.select %14, %31, %30 : vector<1x128xi1>, vector<1x128xf32>
    %33 = vector.broadcast %3 : f32 to vector<1x128xf32>
    %34 = arith.select %12, %33, %32 : vector<1x128xi1>, vector<1x128xf32>
    %35 = arith.mulf %27, %34 : vector<1x128xf32>
    %36 = tpu.concatenate %27, %35 in 0 : vector<1x128xf32>, vector<1x128xf32> -> vector<2x128xf32>
    %cst_1 = arith.constant dense<0.000000e+00> : vector<2xf32>
    %37 = vector.multi_reduction <add>, %36, %cst_1 [1] : vector<2x128xf32> to vector<2xf32>
    %38 = vector.shape_cast %37 : vector<2xf32> to vector<2x1xf32>
    %39 = vector.extract_strided_slice %38 {offsets = [0, 0], sizes = [1, 1], strides = [1, 1]} : vector<2x1xf32> to vector<1x1xf32>
    %40 = vector.extract_strided_slice %38 {offsets = [1, 0], sizes = [1, 1], strides = [1, 1]} : vector<2x1xf32> to vector<1x1xf32>
    %cst_2 = arith.constant 1.000000e+00 : f32
    %41 = vector.broadcast %cst_2 : f32 to vector<1x1xf32>
    %42 = arith.divf %41, %39 : vector<1x1xf32>
    %43 = arith.mulf %40, %42 : vector<1x1xf32>
    %44 = vector.broadcast %42 : vector<1x1xf32> to vector<1x128xf32>
    %45 = arith.mulf %27, %44 : vector<1x128xf32>
    %46 = vector.shape_cast %43 : vector<1x1xf32> to vector<1x1xf32>
    %47 = vector.broadcast %46 : vector<1x1xf32> to vector<1x128xf32>
    %48 = arith.select %10, %47, %45 : vector<1x128xi1>, vector<1x128xf32>
    %c0_3 = arith.constant 0 : index
    %c0_4 = arith.constant 0 : index
    %49 = vector.load %arg1[%c0_3, %c0_4] : memref<1x128xf32, #tpu.memory_space<vmem>>, vector<1x128xf32>
    tpu.vector_store %arg1[%c0_3, %c0_4], %48 {strides = array<i32>} : memref<1x128xf32, #tpu.memory_space<vmem>>, vector<1x128xf32>,
    return
  }
}

</mosaic_0001>

<llo_original>
// kernel: adaptive_byol_loss.1
$region0: #{adaptive_byol_loss.1}
  #allocation0 [shape = 'u32[]', space=smem, size = 0x4, offset = 0x4, fixed_abs, tag = 'smem constant byte address 0x4 - core index']
  #allocation1 [shape = 'u32[144,128]{1,0:T(1,128)}', space=vmem, size = 0x12000, scoped, tag = 'internal scratch']
  %s0 = inlined_call_operand.vmem [shape: f32[6], index: 0, kind: input, shape index: {}]
  %s1 = inlined_call_operand.vmem [shape: f32[1,128], index: 1, kind: output, shape index: {}]
  %s2 = sld [smem:[#allocation0]]
  $region18: #{adaptive_byol_loss.1} parent=0
    _
  %s4 = ssub.s32 1, %s2
  %s5 = scalar_select 0, %s4, %s2
  $region1: #{adaptive_byol_loss.1} parent=0
    #allocation2 [shape = 'u8[512]{0}', space=smem, size = 0x200, scoped, tag = 'input window, operand 0, single buffered']
    #allocation3 [shape = 's32[1]{0}', space=sflag, size = 0x4, scoped, tag = 'scoped memory for adaptive_byol_loss.1']
    %6 = vsyncpa [#allocation3], 0
    // Predicated region
    $region2: #{adaptive_byol_loss.1} parent=1 // pred_check
      _
    $region3: #{adaptive_byol_loss.1} parent=1 // pred_check_branch
      %8 = sbr.rel (0) target = $region5
    $region4: #{adaptive_byol_loss.1} parent=1 // pred_region
      %s10 = ssub.s32 16, 16
      %11 = vsyncadd [#allocation3], %s10
      %s13 = sshll.u32 %s0, 4
      %s14 = int_to_ptr.vmem [resolvable:$true] %s13
      %16 = dma.vmem_to_smem %s14, 16, [#allocation2], [#allocation3]
    $region5: #{adaptive_byol_loss.1} parent=1 // pred_fallthru
      _
    // Predicated region
    $region6: #{adaptive_byol_loss.1} parent=1 // pred_check
      _
    $region7: #{adaptive_byol_loss.1} parent=1 // pred_check_branch
      %18 = sbr.rel (0) target = $region9
    $region8: #{adaptive_byol_loss.1} parent=1 // pred_region
      %19 = dma.done [#allocation3], 16
    $region9: #{adaptive_byol_loss.1} parent=1 // pred_fallthru
      _
    %20 = sfence
    %s21 = sld [smem:[#allocation2]]
    %s22 = sld [smem:[#allocation2 + $0x1]]
    %s23 = sld [smem:[#allocation2 + $0x2]]
    %s24 = sld [smem:[#allocation2 + $0x3]]
    %s25 = sld [smem:[#allocation2 + $0x4]]
    %s26 = sld [smem:[#allocation2 + $0x5]]
    %s27 = smax.f32 %s21, %s22
    %s28 = smax.f32 %s27, %s23
    %v29 = vlaneseq
    %v30 = vand.u32 %v29, 127
    %vm31 = vcmp.eq.s32.totalorder %v30, 0
    %vm32 = vcmp.eq.s32.totalorder %v30, 1
    %vm33 = vcmp.eq.s32.totalorder %v30, 2
    %vm34 = vcmp.eq.s32.totalorder %v30, 3
    %s35 = ssub.f32 %s21, %s28
    %s36 = ssub.f32 %s22, %s28
    %s37 = ssub.f32 %s23, %s28
    %v38 = vstv %s37
    %v39 = vsel %vm34, %v38, -1e+30
    %v40 = vstv %s36
    %v41 = vsel %vm33, %v40, %v39
    %v42 = vstv %s35
    %v43 = vsel %vm32, %v42, %v41
    %v44 = vmul.f32 %v43, 1.442695
    %v45 = vpow.pop %v44
    %v46 = vstv %s26
    %v47 = vsel %vm34, %v46, 0.0
    %v48 = vstv %s25
    %v49 = vsel %vm33, %v48, %v47
    %v50 = vstv %s24
    %v51 = vsel %vm32, %v50, %v49
    %v52 = vmul.f32 %v45, %v51
    %vm53 = vcmask 1040384
    %v54 = vsel %vm53, %v45, %v52
    %vm55 = vcmask 1041408
    %v56 = vsel %vm55, %v54, 0.0
    %57 = vadd.xlane.f32.xlu0 %v56
    %v58 = vpop.xlane.xlu0 %57
    %v59 = vrcp.pop %v58
    %v60 = vmul.f32 1.0, %v59
    %v62 = vrot.slane %v60, 7
    %v64 = vmul.f32 %v58, %v62
    %v65 = vmul.f32 %v45, %v60
    %67 = vset.pattern.permute.xlu0 0
    %68 = vperm.xlu0 %67, %v64
    %v69 = vpop.permute.xlu0 %68
    %v72 = vrot.slane %v65, 7
    %v74 = vsel %vm31, %v69, %v72
    %75 = vst [vmem:[%s1 - $0x1] sm:$0x2] %v74
    // Predicated region
    $region10: #{adaptive_byol_loss.1} parent=1 // pred_check
      _
    $region11: #{adaptive_byol_loss.1} parent=1 // pred_check_branch
      %77 = sbr.rel (0) target = $region13
    $region12: #{adaptive_byol_loss.1} parent=1 // pred_region
      _
    $region13: #{adaptive_byol_loss.1} parent=1 // pred_fallthru
      _
    // Predicated region
    $region14: #{adaptive_byol_loss.1} parent=1 // pred_check
      _
    $region15: #{adaptive_byol_loss.1} parent=1 // pred_check_branch
      %79 = sbr.rel (0) target = $region17
    $region16: #{adaptive_byol_loss.1} parent=1 // pred_region
      _
    $region17: #{adaptive_byol_loss.1} parent=1 // pred_fallthru
      _
    %80 = vsyncpa [#allocation3], 1

</llo_original>
